<compile_context>
chip_gen: v7x
topology: tpu7x:2x2x1
jax: 0.10.0
libtpu: 0.0.40
codegen_flags: <defaults>
</compile_context>

<pallas_src>
import jax
import jax.numpy as jnp
from jax.experimental import pallas as pl
from jax.experimental.pallas import tpu as pltpu

LANE = 128


def _round_up(x, m):
    return (x + m - 1) // m * m


def _pad2(a, rows, cols):
    r, c = a.shape
    return jnp.pad(a, ((0, rows - r), (0, cols - c)))


def _row_tiling(n):
    """Padded row count and row-tile size for the adj-streamed GCN calls."""
    if n <= 512:
        n_pad = _round_up(n, LANE)
        return n_pad, n_pad                       # single (lane-dense) tile
    tm = 256 if n >= 2048 else 128
    return _round_up(n, tm), tm


def _vmem_budget(tile_bytes):
    """Scoped-VMEM limit: double-buffered tiles + headroom, capped safely."""
    need = 2 * sum(tile_bytes) + (4 << 20)
    return int(min(max(need, 16 << 20), 48 << 20))


# ---------------------------------------------------------------------------
# Kernel A: both FeatureDense layers + ReLU + concat + (.) @ W_gcn1
# ---------------------------------------------------------------------------
def _feat_xw1_kernel(lnc_ref, dis_ref, wl_ref, bl_ref, wd_ref, bd_ref,
                     w1_ref, xw1_ref):
    n_l = lnc_ref.shape[0]
    n_d = dis_ref.shape[0]
    n = n_l + n_d
    n_pad, h2p = xw1_ref.shape

    lncx = jnp.dot(lnc_ref[...], wl_ref[...],
                   preferred_element_type=jnp.float32) + bl_ref[...]
    lncx = jnp.maximum(lncx, 0.0).astype(jnp.bfloat16)
    disx = jnp.dot(dis_ref[...], wd_ref[...],
                   preferred_element_type=jnp.float32) + bd_ref[...]
    disx = jnp.maximum(disx, 0.0).astype(jnp.bfloat16)

    top = jnp.dot(lncx, w1_ref[...], preferred_element_type=jnp.float32)
    bot = jnp.dot(disx, w1_ref[...], preferred_element_type=jnp.float32)
    parts = [top, bot]
    if n_pad > n:  # zero the padded rows (static at trace time)
        parts.append(jnp.zeros((n_pad - n, h2p), jnp.float32))
    xw1_ref[...] = jnp.concatenate(parts, axis=0).astype(xw1_ref.dtype)


# ---------------------------------------------------------------------------
# Kernel B: GCN layer 1 (+ReLU) fused with the next layer's feature matmul.
#   hw2_tile = relu(adj_tile @ xw1 + b1) @ W2
# ---------------------------------------------------------------------------
def _gcn1_w2_kernel(adj_ref, xw1_ref, b1_ref, w2_ref, hw2_ref):
    s = jnp.dot(adj_ref[...], xw1_ref[...],
                preferred_element_type=jnp.float32) + b1_ref[...]
    h = jnp.maximum(s, 0.0).astype(jnp.bfloat16)
    hw2_ref[...] = jnp.dot(
        h, w2_ref[...], preferred_element_type=jnp.float32
    ).astype(hw2_ref.dtype)


# ---------------------------------------------------------------------------
# Kernel C: GCN layer 2 (no activation).
#   z_tile = adj_tile @ hw2 + b2
# ---------------------------------------------------------------------------
def _gcn2_kernel(adj_ref, hw2_ref, b2_ref, z_ref):
    z_ref[...] = jnp.dot(adj_ref[...], hw2_ref[...],
                         preferred_element_type=jnp.float32) + b2_ref[...]


# ---------------------------------------------------------------------------
# Wrapper
# ---------------------------------------------------------------------------
def encoder_forward(lnc_x, dis_x, adj, params):
    (w_lnc, b_lnc, w_dis, b_dis, w_g1, b_g1, w_g2, b_g2) = params
    n_l, lnc_in = lnc_x.shape
    n_d, dis_in = dis_x.shape
    n = n_l + n_d
    h1 = w_lnc.shape[1]
    h2 = w_g1.shape[1]
    h3 = w_g2.shape[1]

    lnc_in_p = _round_up(lnc_in, LANE)
    dis_in_p = _round_up(dis_in, LANE)
    h1p = _round_up(h1, LANE)
    h2p = _round_up(h2, LANE)
    h3p = _round_up(h3, LANE)
    n_pad, tm = _row_tiling(n)

    bf16, f32 = jnp.bfloat16, jnp.float32

    # Zero-pad + cast. Matmul operands -> bf16; biases stay f32.
    lnc_xp = _pad2(lnc_x, n_l, lnc_in_p).astype(bf16)
    dis_xp = _pad2(dis_x, n_d, dis_in_p).astype(bf16)
    adj_p = _pad2(adj, n_pad, n_pad).astype(bf16)
    wl_p = _pad2(w_lnc, lnc_in_p, h1p).astype(bf16)
    wd_p = _pad2(w_dis, dis_in_p, h1p).astype(bf16)
    w1_p = _pad2(w_g1, h1p, h2p).astype(bf16)
    w2_p = _pad2(w_g2, h2p, h3p).astype(bf16)
    bl_p = _pad2(b_lnc, 1, h1p).astype(f32)
    bd_p = _pad2(b_dis, 1, h1p).astype(f32)
    b1_p = _pad2(b_g1, 1, h2p).astype(f32)
    b2_p = _pad2(b_g2, 1, h3p).astype(f32)

    # ---- call A: dense layers + x @ W1 (small, single grid point) --------
    a_inputs = (lnc_xp, dis_xp, wl_p, bl_p, wd_p, bd_p, w1_p)
    a_tiles = [int(a.size) * a.dtype.itemsize for a in a_inputs] + \
              [n_pad * h2p * 2]
    a_flops = (2 * n_l * lnc_in_p * h1p + 2 * n_d * dis_in_p * h1p
               + 2 * n * h1p * h2p)
    xw1 = pl.pallas_call(
        _feat_xw1_kernel,
        out_shape=jax.ShapeDtypeStruct((n_pad, h2p), bf16),
        grid_spec=pltpu.PrefetchScalarGridSpec(
            num_scalar_prefetch=0,
            grid=(1,),
            in_specs=[pl.BlockSpec(a.shape, lambda i: (0, 0))
                      for a in a_inputs],
            out_specs=pl.BlockSpec((n_pad, h2p), lambda i: (0, 0)),
        ),
        compiler_params=pltpu.CompilerParams(
            dimension_semantics=("arbitrary",),
            vmem_limit_bytes=_vmem_budget(a_tiles)),
        cost_estimate=pl.CostEstimate(
            flops=a_flops, transcendentals=0,
            bytes_accessed=sum(a_tiles)),
    )(*a_inputs)

    grid = (n_pad // tm,)

    # ---- call B: hw2 = relu(adj @ xw1 + b1) @ W2 (row-tiled over adj) ----
    b_tiles = [tm * n_pad * 2, n_pad * h2p * 2, h2p * 4, h2p * h3p * 2,
               tm * h3p * 2]
    hw2 = pl.pallas_call(
        _gcn1_w2_kernel,
        out_shape=jax.ShapeDtypeStruct((n_pad, h3p), bf16),
        grid_spec=pltpu.PrefetchScalarGridSpec(
            num_scalar_prefetch=0,
            grid=grid,
            in_specs=[
                pl.BlockSpec((tm, n_pad), lambda i: (i, 0)),
                pl.BlockSpec((n_pad, h2p), lambda i: (0, 0)),
                pl.BlockSpec((1, h2p), lambda i: (0, 0)),
                pl.BlockSpec((h2p, h3p), lambda i: (0, 0)),
            ],
            out_specs=pl.BlockSpec((tm, h3p), lambda i: (i, 0)),
        ),
        compiler_params=pltpu.CompilerParams(
            dimension_semantics=("parallel",),
            vmem_limit_bytes=_vmem_budget(b_tiles)),
        cost_estimate=pl.CostEstimate(
            flops=2 * n_pad * n_pad * h2p + 2 * n_pad * h2p * h3p,
            transcendentals=0,
            bytes_accessed=(n_pad * n_pad * 2 + n_pad * h2p * 2
                            + h2p * h3p * 2 + n_pad * h3p * 2)),
    )(adj_p, xw1, b1_p, w2_p)

    # ---- call C: z = adj @ hw2 + b2 (row-tiled, f32 lane-dense output) ---
    c_tiles = [tm * n_pad * 2, n_pad * h3p * 2, h3p * 4, tm * h3p * 4]
    z_full = pl.pallas_call(
        _gcn2_kernel,
        out_shape=jax.ShapeDtypeStruct((n_pad, h3p), f32),
        grid_spec=pltpu.PrefetchScalarGridSpec(
            num_scalar_prefetch=0,
            grid=grid,
            in_specs=[
                pl.BlockSpec((tm, n_pad), lambda i: (i, 0)),
                pl.BlockSpec((n_pad, h3p), lambda i: (0, 0)),
                pl.BlockSpec((1, h3p), lambda i: (0, 0)),
            ],
            out_specs=pl.BlockSpec((tm, h3p), lambda i: (i, 0)),
        ),
        compiler_params=pltpu.CompilerParams(
            dimension_semantics=("parallel",),
            vmem_limit_bytes=_vmem_budget(c_tiles)),
        cost_estimate=pl.CostEstimate(
            flops=2 * n_pad * n_pad * h3p,
            transcendentals=0,
            bytes_accessed=(n_pad * n_pad * 2 + n_pad * h3p * 2
                            + n_pad * h3p * 4)),
    )(adj_p, hw2, b2_p)

    # Strip row/lane padding.
    return z_full[:n, :h3]


def init_params(key, lnc_in, dis_in, h1, h2, h3):
    ks = jax.random.split(key, 4)

    def lin(k, fan_in, fan_out):
        scale = 1.0 / jnp.sqrt(jnp.float32(fan_in))
        w = jax.random.uniform(k, (fan_in, fan_out), jnp.float32,
                               -scale, scale)
        b = jnp.zeros((1, fan_out), jnp.float32)
        return w, b

    w_lnc, b_lnc = lin(ks[0], lnc_in, h1)   # lncdense
    w_dis, b_dis = lin(ks[1], dis_in, h1)   # disdense
    w_g1, b_g1 = lin(ks[2], h1, h2)         # gcn1
    w_g2, b_g2 = lin(ks[3], h2, h3)         # gcn2
    # lncdense2 / disdense2 / gcn3 / dense exist in __init__ but are unused
    # in forward(), so they are not materialized here.
    return (w_lnc, b_lnc, w_dis, b_dis, w_g1, b_g1, w_g2, b_g2)


def reference_forward(lnc_x, dis_x, adj, params):
    """Reference with the same bf16-operand / f32-accumulate matmuls."""
    (w_lnc, b_lnc, w_dis, b_dis, w_g1, b_g1, w_g2, b_g2) = params

    def mm(a, b):
        return jnp.dot(a.astype(jnp.bfloat16), b.astype(jnp.bfloat16),
                       preferred_element_type=jnp.float32)

    lncx = jnp.maximum(mm(lnc_x, w_lnc) + b_lnc, 0.0)
    disx = jnp.maximum(mm(dis_x, w_dis) + b_dis, 0.0)
    x = jnp.concatenate([lncx, disx], axis=0)
    xw1 = mm(x, w_g1).astype(jnp.bfloat16)          # kernel stores xw1 bf16
    h = jnp.maximum(mm(adj, xw1) + b_g1, 0.0)
    hw2 = mm(h, w_g2).astype(jnp.bfloat16)          # kernel stores hw2 bf16
    z = mm(adj, hw2) + b_g2
    return z


if __name__ == "__main__":
    key = jax.random.PRNGKey(0)
    k_in, k_par, k_adj = jax.random.split(key, 3)

    # Small shapes consistent with the module's forward().
    n_lnc, n_dis = 8, 8
    lnc_in, dis_in = 32, 24
    h1, h2, h3 = 32, 32, 16
    n = n_lnc + n_dis

    k1, k2 = jax.random.split(k_in)
    lnc_x = jax.random.normal(k1, (n_lnc, lnc_in), jnp.float32)
    dis_x = jax.random.normal(k2, (n_dis, dis_in), jnp.float32)
    adj = jax.random.uniform(k_adj, (n, n), jnp.float32)
    adj = 0.5 * (adj + adj.T)  # symmetric adjacency-like matrix

    params = init_params(k_par, lnc_in, dis_in, h1, h2, h3)

    z = encoder_forward(lnc_x, dis_x, adj, params)
    jax.block_until_ready(z)

    z_ref = reference_forward(lnc_x, dis_x, adj, params)
    assert z.shape == (n, h3)
    assert jnp.allclose(z, z_ref, atol=1e-2, rtol=1e-2), \
        float(jnp.max(jnp.abs(z - z_ref)))

    print("KERNEL_OK")
</pallas_src>

<mosaic_0001>
module attributes {stable_mosaic.version = 11 : i64} {
  func.func @_feat_xw1_kernel(%arg0: i32, %arg1: memref<8x128xbf16, #tpu.memory_space<vmem>>, %arg2: memref<8x128xbf16, #tpu.memory_space<vmem>>, %arg3: memref<128x128xbf16, #tpu.memory_space<vmem>>, %arg4: memref<1x128xf32, #tpu.memory_space<vmem>>, %arg5: memref<128x128xbf16, #tpu.memory_space<vmem>>, %arg6: memref<1x128xf32, #tpu.memory_space<vmem>>, %arg7: memref<128x128xbf16, #tpu.memory_space<vmem>>, %arg8: memref<128x128xbf16, #tpu.memory_space<vmem>>) attributes {dimension_semantics = [#tpu.dimension_semantics<arbitrary>], iteration_bounds = array<i64: 1>, scalar_prefetch = 0 : i64, scratch_operands = 0 : i64, tpu.core_type = #tpu.core_type<tc>, window_params = [{pipeline_mode = #tpu.pipeline_mode<synchronous>, transform_indices = @transform_0, window_bounds = array<i64: 8, 128>}, {pipeline_mode = #tpu.pipeline_mode<synchronous>, transform_indices = @transform_1, window_bounds = array<i64: 8, 128>}, {pipeline_mode = #tpu.pipeline_mode<synchronous>, transform_indices = @transform_2, window_bounds = array<i64: 128, 128>}, {pipeline_mode = #tpu.pipeline_mode<synchronous>, transform_indices = @transform_3, window_bounds = array<i64: 1, 128>}, {pipeline_mode = #tpu.pipeline_mode<synchronous>, transform_indices = @transform_4, window_bounds = array<i64: 128, 128>}, {pipeline_mode = #tpu.pipeline_mode<synchronous>, transform_indices = @transform_5, window_bounds = array<i64: 1, 128>}, {pipeline_mode = #tpu.pipeline_mode<synchronous>, transform_indices = @transform_6, window_bounds = array<i64: 128, 128>}, {pipeline_mode = #tpu.pipeline_mode<synchronous>, transform_indices = @transform_7, window_bounds = array<i64: 128, 128>}]} {
    %c0 = arith.constant 0 : index
    %c0_0 = arith.constant 0 : index
    %0 = vector.load %arg1[%c0, %c0_0] : memref<8x128xbf16, #tpu.memory_space<vmem>>, vector<8x128xbf16>
    %c0_1 = arith.constant 0 : index
    %c0_2 = arith.constant 0 : index
    %1 = vector.load %arg3[%c0_1, %c0_2] : memref<128x128xbf16, #tpu.memory_space<vmem>>, vector<128x128xbf16>
    %cst = arith.constant dense<0.000000e+00> : vector<8x128xf32>
    %2 = tpu.matmul %0, %1, %cst {dimension_numbers = #tpu.dot_dimension_numbers<[1], [0], [0], [1], [0, 0, 1, 1], [], []>} : vector<8x128xbf16>, vector<128x128xbf16>, vector<8x128xf32> -> vector<8x128xf32>
    %c0_3 = arith.constant 0 : index
    %c0_4 = arith.constant 0 : index
    %3 = vector.load %arg4[%c0_3, %c0_4] : memref<1x128xf32, #tpu.memory_space<vmem>>, vector<1x128xf32>
    %4 = vector.broadcast %3 : vector<1x128xf32> to vector<8x128xf32>
    %5 = arith.addf %2, %4 : vector<8x128xf32>
    %cst_5 = arith.constant 0.000000e+00 : f32
    %6 = vector.broadcast %cst_5 : f32 to vector<8x128xf32>
    %7 = arith.maximumf %5, %6 : vector<8x128xf32>
    %8 = arith.truncf %7 : vector<8x128xf32> to vector<8x128xbf16>
    %c0_6 = arith.constant 0 : index
    %c0_7 = arith.constant 0 : index
    %9 = vector.load %arg2[%c0_6, %c0_7] : memref<8x128xbf16, #tpu.memory_space<vmem>>, vector<8x128xbf16>
    %c0_8 = arith.constant 0 : index
    %c0_9 = arith.constant 0 : index
    %10 = vector.load %arg5[%c0_8, %c0_9] : memref<128x128xbf16, #tpu.memory_space<vmem>>, vector<128x128xbf16>
    %cst_10 = arith.constant dense<0.000000e+00> : vector<8x128xf32>
    %11 = tpu.matmul %9, %10, %cst_10 {dimension_numbers = #tpu.dot_dimension_numbers<[1], [0], [0], [1], [0, 0, 1, 1], [], []>} : vector<8x128xbf16>, vector<128x128xbf16>, vector<8x128xf32> -> vector<8x128xf32>
    %c0_11 = arith.constant 0 : index
    %c0_12 = arith.constant 0 : index
    %12 = vector.load %arg6[%c0_11, %c0_12] : memref<1x128xf32, #tpu.memory_space<vmem>>, vector<1x128xf32>
    %13 = vector.broadcast %12 : vector<1x128xf32> to vector<8x128xf32>
    %14 = arith.addf %11, %13 : vector<8x128xf32>
    %cst_13 = arith.constant 0.000000e+00 : f32
    %15 = vector.broadcast %cst_13 : f32 to vector<8x128xf32>
    %16 = arith.maximumf %14, %15 : vector<8x128xf32>
    %17 = arith.truncf %16 : vector<8x128xf32> to vector<8x128xbf16>
    %c0_14 = arith.constant 0 : index
    %c0_15 = arith.constant 0 : index
    %18 = vector.load %arg7[%c0_14, %c0_15] : memref<128x128xbf16, #tpu.memory_space<vmem>>, vector<128x128xbf16>
    %cst_16 = arith.constant dense<0.000000e+00> : vector<8x128xf32>
    %19 = tpu.matmul %8, %18, %cst_16 {dimension_numbers = #tpu.dot_dimension_numbers<[1], [0], [0], [1], [0, 0, 1, 1], [], []>} : vector<8x128xbf16>, vector<128x128xbf16>, vector<8x128xf32> -> vector<8x128xf32>
    %c0_17 = arith.constant 0 : index
    %c0_18 = arith.constant 0 : index
    %20 = vector.load %arg7[%c0_17, %c0_18] : memref<128x128xbf16, #tpu.memory_space<vmem>>, vector<128x128xbf16>
    %cst_19 = arith.constant dense<0.000000e+00> : vector<8x128xf32>
    %21 = tpu.matmul %17, %20, %cst_19 {dimension_numbers = #tpu.dot_dimension_numbers<[1], [0], [0], [1], [0, 0, 1, 1], [], []>} : vector<8x128xbf16>, vector<128x128xbf16>, vector<8x128xf32> -> vector<8x128xf32>
    %cst_20 = arith.constant 0.000000e+00 : f32
    %22 = vector.broadcast %cst_20 : f32 to vector<112x128xf32>
    %23 = tpu.concatenate %19, %21, %22 in 0 : vector<8x128xf32>, vector<8x128xf32>, vector<112x128xf32> -> vector<128x128xf32>
    %24 = arith.truncf %23 : vector<128x128xf32> to vector<128x128xbf16>
    %c0_21 = arith.constant 0 : index
    %c0_22 = arith.constant 0 : index
    %25 = vector.load %arg8[%c0_21, %c0_22] : memref<128x128xbf16, #tpu.memory_space<vmem>>, vector<128x128xbf16>
    tpu.vector_store %arg8[%c0_21, %c0_22], %24 {strides = array<i32>} : memref<128x128xbf16, #tpu.memory_space<vmem>>, vector<128x128xbf16>,
    return
  }
  func.func @transform_0(%arg0: i32) -> (i32, i32) {
    %c0_i32 = arith.constant 0 : i32
    %c0_i32_0 = arith.constant 0 : i32
    %c0_i32_1 = arith.constant 0 : i32
    return %c0_i32, %c0_i32_0 : i32, i32
  }
  func.func @transform_1(%arg0: i32) -> (i32, i32) {
    %c0_i32 = arith.constant 0 : i32
    %c0_i32_0 = arith.constant 0 : i32
    %c0_i32_1 = arith.constant 0 : i32
    return %c0_i32, %c0_i32_0 : i32, i32
  }
  func.func @transform_2(%arg0: i32) -> (i32, i32) {
    %c0_i32 = arith.constant 0 : i32
    %c0_i32_0 = arith.constant 0 : i32
    %c0_i32_1 = arith.constant 0 : i32
    return %c0_i32, %c0_i32_0 : i32, i32
  }
  func.func @transform_3(%arg0: i32) -> (i32, i32) {
    %c0_i32 = arith.constant 0 : i32
    %c0_i32_0 = arith.constant 0 : i32
    %c0_i32_1 = arith.constant 0 : i32
    return %c0_i32, %c0_i32_0 : i32, i32
  }
  func.func @transform_4(%arg0: i32) -> (i32, i32) {
    %c0_i32 = arith.constant 0 : i32
    %c0_i32_0 = arith.constant 0 : i32
    %c0_i32_1 = arith.constant 0 : i32
    return %c0_i32, %c0_i32_0 : i32, i32
  }
  func.func @transform_5(%arg0: i32) -> (i32, i32) {
    %c0_i32 = arith.constant 0 : i32
    %c0_i32_0 = arith.constant 0 : i32
    %c0_i32_1 = arith.constant 0 : i32
    return %c0_i32, %c0_i32_0 : i32, i32
  }
  func.func @transform_6(%arg0: i32) -> (i32, i32) {
    %c0_i32 = arith.constant 0 : i32
    %c0_i32_0 = arith.constant 0 : i32
    %c0_i32_1 = arith.constant 0 : i32
    return %c0_i32, %c0_i32_0 : i32, i32
  }
  func.func @transform_7(%arg0: i32) -> (i32, i32) {
    %c0_i32 = arith.constant 0 : i32
    %c0_i32_0 = arith.constant 0 : i32
    %c0_i32_1 = arith.constant 0 : i32
    return %c0_i32, %c0_i32_0 : i32, i32
  }
}

</mosaic_0001>

<llo_original>
// kernel: tpu_custom_call.1
$region0: #{tpu_custom_call.1}
  #allocation0 [shape = 'u32[]', space=smem, size = 0x4, offset = 0x4, fixed_abs, tag = 'smem constant byte address 0x4 - core index']
  #allocation1 [shape = 'u32[144,128]{1,0:T(1,128)}', space=vmem, size = 0x12000, scoped, tag = 'internal scratch']
  %s0 = inlined_call_operand.hbm [shape: bf16[8,128], index: 0, kind: input, shape index: {}]
  %s1 = inlined_call_operand.hbm [shape: bf16[8,128], index: 1, kind: input, shape index: {}]
  %s2 = inlined_call_operand.hbm [shape: bf16[128,128], index: 2, kind: input, shape index: {}]
  %s3 = inlined_call_operand.vmem [shape: f32[1,128], index: 3, kind: input, shape index: {}]
  %s4 = inlined_call_operand.hbm [shape: bf16[128,128], index: 4, kind: input, shape index: {}]
  %s5 = inlined_call_operand.vmem [shape: f32[1,128], index: 5, kind: input, shape index: {}]
  %s6 = inlined_call_operand.hbm [shape: bf16[128,128], index: 6, kind: input, shape index: {}]
  %s7 = inlined_call_operand.hbm [shape: bf16[128,128], index: 7, kind: output, shape index: {}]
  %s8 = sld [smem:[#allocation0]]
  $region58: #{tpu_custom_call.1} parent=0
    _
  %s10 = ssub.s32 1, %s8
  %s11 = scalar_select 0, %s10, %s8
  $region1: #{tpu_custom_call.1} parent=0
    #allocation2 [shape = 'u8[2048]{0}', space=vmem, size = 0x800, scoped, tag = 'input window, operand 0, single buffered']
    #allocation3 [shape = 's32[1]{0}', space=sflag, size = 0x4, scoped, tag = 'scoped memory for tpu_custom_call.1']
    #allocation4 [shape = 's32[1]{0}', space=sflag, size = 0x4, scoped, tag = 'scoped memory for tpu_custom_call.1']
    #allocation5 [shape = 'u8[2048]{0}', space=vmem, size = 0x800, scoped, tag = 'input window, operand 1, single buffered']
    #allocation6 [shape = 's32[1]{0}', space=sflag, size = 0x4, scoped, tag = 'scoped memory for tpu_custom_call.1']
    #allocation7 [shape = 'u8[32768]{0}', space=vmem, size = 0x8000, scoped, tag = 'input window, operand 2, single buffered']
    #allocation8 [shape = 'u8[32768]{0}', space=vmem, size = 0x8000, scoped, tag = 'input window, operand 4, single buffered']
    #allocation9 [shape = 's32[1]{0}', space=sflag, size = 0x4, scoped, tag = 'scoped memory for tpu_custom_call.1']
    #allocation10 [shape = 'u8[32768]{0}', space=vmem, size = 0x8000, scoped, tag = 'input window, operand 6, single buffered']
    #allocation11 [shape = 'u8[32768]{0}', space=vmem, size = 0x8000, scoped, tag = 'output window, operand 0, single buffered']
    %12 = vsyncpa [#allocation3], 0
    %13 = vsyncpa [#allocation6], 0
    %14 = vsyncpa [#allocation9], 0
    %15 = vsyncpa [#allocation4], 0
    // Predicated region
    $region2: #{tpu_custom_call.1} parent=1 // pred_check
      _
    $region3: #{tpu_custom_call.1} parent=1 // pred_check_branch
      %17 = sbr.rel (0) target = $region5
    $region4: #{tpu_custom_call.1} parent=1 // pred_region
      %s19 = ssub.s32 64, 64
      %20 = vsyncadd [#allocation3], %s19
      %s22 = sshll.u32 [#allocation2], 4
      %s23 = int_to_ptr.vmem [resolvable:$true] %s22
      %25 = dma.hbm_to_vmem [thread:$0]  %s0, 64, %s23, [#allocation3]
    $region5: #{tpu_custom_call.1} parent=1 // pred_fallthru
      _
    // Predicated region
    $region6: #{tpu_custom_call.1} parent=1 // pred_check
      _
    $region7: #{tpu_custom_call.1} parent=1 // pred_check_branch
      %27 = sbr.rel (0) target = $region9
    $region8: #{tpu_custom_call.1} parent=1 // pred_region
      %s29 = ssub.s32 64, 64
      %30 = vsyncadd [#allocation6], %s29
      %s32 = sshll.u32 [#allocation5], 4
      %s33 = int_to_ptr.vmem [resolvable:$true] %s32
      %35 = dma.hbm_to_vmem [thread:$0]  %s1, 64, %s33, [#allocation6]
    $region9: #{tpu_custom_call.1} parent=1 // pred_fallthru
      _
    // Predicated region
    $region10: #{tpu_custom_call.1} parent=1 // pred_check
      _
    $region11: #{tpu_custom_call.1} parent=1 // pred_check_branch
      %37 = sbr.rel (0) target = $region13
    $region12: #{tpu_custom_call.1} parent=1 // pred_region
      %s39 = ssub.s32 1024, 1024
      %40 = vsyncadd [#allocation6], %s39
      %s41 = sshll.u32 [#allocation7], 4
      %s42 = int_to_ptr.vmem [resolvable:$true] %s41
      %47 = dma.hbm_to_vmem [thread:$0]  %s2, 1024, %s42, [#allocation6], 64, 64, 4
    $region13: #{tpu_custom_call.1} parent=1 // pred_fallthru
      _
    // Predicated region
    $region14: #{tpu_custom_call.1} parent=1 // pred_check
      _
    $region15: #{tpu_custom_call.1} parent=1 // pred_check_branch
      %49 = sbr.rel (0) target = $region17
    $region16: #{tpu_custom_call.1} parent=1 // pred_region
      _
    $region17: #{tpu_custom_call.1} parent=1 // pred_fallthru
      _
    // Predicated region
    $region18: #{tpu_custom_call.1} parent=1 // pred_check
      _
    $region19: #{tpu_custom_call.1} parent=1 // pred_check_branch
      %51 = sbr.rel (0) target = $region21
    $region20: #{tpu_custom_call.1} parent=1 // pred_region
      %s53 = ssub.s32 1024, 1024
      %54 = vsyncadd [#allocation9], %s53
      %s55 = sshll.u32 [#allocation8], 4
      %s56 = int_to_ptr.vmem [resolvable:$true] %s55
      %61 = dma.hbm_to_vmem [thread:$0]  %s4, 1024, %s56, [#allocation9], 64, 64, 4
    $region21: #{tpu_custom_call.1} parent=1 // pred_fallthru
      _
    // Predicated region
    $region22: #{tpu_custom_call.1} parent=1 // pred_check
      _
    $region23: #{tpu_custom_call.1} parent=1 // pred_check_branch
      %63 = sbr.rel (0) target = $region25
    $region24: #{tpu_custom_call.1} parent=1 // pred_region
      _
    $region25: #{tpu_custom_call.1} parent=1 // pred_fallthru
      _
    // Predicated region
    $region26: #{tpu_custom_call.1} parent=1 // pred_check
      _
    $region27: #{tpu_custom_call.1} parent=1 // pred_check_branch
      %65 = sbr.rel (0) target = $region29
    $region28: #{tpu_custom_call.1} parent=1 // pred_region
      %s67 = ssub.s32 1024, 1024
      %68 = vsyncadd [#allocation9], %s67
      %s69 = sshll.u32 [#allocation10], 4
      %s70 = int_to_ptr.vmem [resolvable:$true] %s69
      %75 = dma.hbm_to_vmem [thread:$0]  %s6, 1024, %s70, [#allocation9], 64, 64, 4
    $region29: #{tpu_custom_call.1} parent=1 // pred_fallthru
      _
    // Predicated region
    $region30: #{tpu_custom_call.1} parent=1 // pred_check
      _
    $region31: #{tpu_custom_call.1} parent=1 // pred_check_branch
      %77 = sbr.rel (0) target = $region33
    $region32: #{tpu_custom_call.1} parent=1 // pred_region
      %78 = dma.done [#allocation3], 64
    $region33: #{tpu_custom_call.1} parent=1 // pred_fallthru
      _
    // Predicated region
    $region34: #{tpu_custom_call.1} parent=1 // pred_check
      _
    $region35: #{tpu_custom_call.1} parent=1 // pred_check_branch
      %80 = sbr.rel (0) target = $region37
    $region36: #{tpu_custom_call.1} parent=1 // pred_region
      %81 = dma.done [#allocation6], 64
    $region37: #{tpu_custom_call.1} parent=1 // pred_fallthru
      _
    // Predicated region
    $region38: #{tpu_custom_call.1} parent=1 // pred_check
      _
    $region39: #{tpu_custom_call.1} parent=1 // pred_check_branch
      %83 = sbr.rel (0) target = $region41
    $region40: #{tpu_custom_call.1} parent=1 // pred_region
      %84 = dma.done [#allocation6], 1024
    $region41: #{tpu_custom_call.1} parent=1 // pred_fallthru
      _
    // Predicated region
    $region42: #{tpu_custom_call.1} parent=1 // pred_check
      _
    $region43: #{tpu_custom_call.1} parent=1 // pred_check_branch
      %86 = sbr.rel (0) target = $region45
    $region44: #{tpu_custom_call.1} parent=1 // pred_region
      %87 = dma.done [#allocation9], 1024
    $region45: #{tpu_custom_call.1} parent=1 // pred_fallthru
      _
    // Predicated region
    $region46: #{tpu_custom_call.1} parent=1 // pred_check
      _
    $region47: #{tpu_custom_call.1} parent=1 // pred_check_branch
      %89 = sbr.rel (0) target = $region49
    $region48: #{tpu_custom_call.1} parent=1 // pred_region
      %90 = dma.done [#allocation9], 1024
    $region49: #{tpu_custom_call.1} parent=1 // pred_fallthru
      _
    %v92 = vld [vmem:[#allocation2] sm:$0xf]
    %v93 = vld [vmem:[#allocation7] sm:$0xf]
    %v94 = vld [vmem:[#allocation7 + $0x4] sm:$0xf]
    %v95 = vld [vmem:[#allocation7 + $0x8] sm:$0xf]
    %v96 = vld [vmem:[#allocation7 + $0xc] sm:$0xf]
    %v97 = vld [vmem:[#allocation7 + $0x10] sm:$0xf]
    %v98 = vld [vmem:[#allocation7 + $0x14] sm:$0xf]
    %v99 = vld [vmem:[#allocation7 + $0x18] sm:$0xf]
    %v100 = vld [vmem:[#allocation7 + $0x1c] sm:$0xf]
    %v101 = vld [vmem:[#allocation7 + $0x20] sm:$0xf]
    %v102 = vld [vmem:[#allocation7 + $0x24] sm:$0xf]
    %v103 = vld [vmem:[#allocation7 + $0x28] sm:$0xf]
    %v104 = vld [vmem:[#allocation7 + $0x2c] sm:$0xf]
    %v105 = vld [vmem:[#allocation7 + $0x30] sm:$0xf]
    %v106 = vld [vmem:[#allocation7 + $0x34] sm:$0xf]
    %v107 = vld [vmem:[#allocation7 + $0x38] sm:$0xf]
    %v108 = vld [vmem:[#allocation7 + $0x3c] sm:$0xf]
    %v109 = vld [vmem:[%s3] sm:$0x1]
    %v111 = vlaneseq
    %v112 = vshrl.u32 %v111, 7
    %v113 = vsub.s32 0, %v112
    %v114 = vrot.slane %v109, %v113
    %v132 = vunpack.c.l.b16 %v93
    %v133 = vunpack.c.l.b16 %v94
    %v134 = vunpack.c.l.b16 %v95
    %v135 = vunpack.c.l.b16 %v96
    %v136 = vunpack.c.l.b16 %v97
    %v137 = vunpack.c.l.b16 %v98
    %v138 = vunpack.c.l.b16 %v99
    %v139 = vunpack.c.l.b16 %v100
    %v140 = vunpack.c.l.b16 %v101
    %v141 = vunpack.c.l.b16 %v102
    %v142 = vunpack.c.l.b16 %v103
    %v143 = vunpack.c.l.b16 %v104
    %v144 = vunpack.c.l.b16 %v105
    %v145 = vunpack.c.l.b16 %v106
    %v146 = vunpack.c.l.b16 %v107
    %v147 = vunpack.c.l.b16 %v108
    %v148 = vpack.c.b16 %v133, %v132
    %v149 = vpack.c.b16 %v135, %v134
    %v150 = vpack.c.b16 %v137, %v136
    %v151 = vpack.c.b16 %v139, %v138
    %v152 = vpack.c.b16 %v141, %v140
    %v153 = vpack.c.b16 %v143, %v142
    %v154 = vpack.c.b16 %v145, %v144
    %v155 = vpack.c.b16 %v147, %v146
    %164 = vmatprep.subr.bf16.mxu0 0
    %165 = vmatpush1.bf16.msra.mxu0 %v148
    %166 = vmatprep.subr.bf16.mxu0 0
    %167 = vmatpush1.bf16.msra.mxu0 %v149
    %168 = vmatprep.subr.bf16.mxu0 0
    %169 = vmatpush1.bf16.msra.mxu0 %v150
    %170 = vmatprep.subr.bf16.mxu0 0
    %171 = vmatpush1.bf16.msra.mxu0 %v151
    %172 = vmatprep.subr.bf16.mxu0 0
    %173 = vmatpush1.bf16.msra.mxu0 %v152
    %174 = vmatprep.subr.bf16.mxu0 0
    %175 = vmatpush1.bf16.msra.mxu0 %v153
    %176 = vmatprep.subr.bf16.mxu0 0
    %177 = vmatpush1.bf16.msra.mxu0 %v154
    %178 = vmatprep.subr.bf16.mxu0 0
    %179 = vmatpush1.bf16.msra.mxu0 %v155
    %180 = vmatprep.subr.bf16.mxu0 0
    %181 = vmatpush1.bf16.msra.mxu0 0
    %182 = vmatprep.subr.bf16.mxu0 0
    %183 = vmatpush1.bf16.msra.mxu0 0
    %184 = vmatprep.subr.bf16.mxu0 0
    %185 = vmatpush1.bf16.msra.mxu0 0
    %186 = vmatprep.subr.bf16.mxu0 0
    %187 = vmatpush1.bf16.msra.mxu0 0
    %188 = vmatprep.subr.bf16.mxu0 0
    %189 = vmatpush1.bf16.msra.mxu0 0
    %190 = vmatprep.subr.bf16.mxu0 0
    %191 = vmatpush1.bf16.msra.mxu0 0
    %192 = vmatprep.subr.bf16.mxu0 0
    %193 = vmatpush1.bf16.msra.mxu0 0
    %194 = vmatprep.subr.bf16.mxu0 0
    %195 = vmatpush1.bf16.msra.mxu0 0
    %196 = vmatprep.mubr.bf16.mxu0 0
    %197 = vmatmul.mubr.bf16.gmra.mrb[0].mxu0 %v92
    %v198 = vpop.f32.mrb[0].mxu0
    %v199 = vadd.f32 %v114, %v198
    %v200 = vpop.f32.mrb[0].mxu0
    %v201 = vpop.f32.mrb[0].mxu0
    %v202 = vpop.f32.mrb[0].mxu0
    %203 = vdwg.mxu0
    %v204 = vmax.f32 %v199, 0.0
    %v205 = vpack.c.bf16 %v204, %v204
    %v206 = vld [vmem:[#allocation5] sm:$0xf]
    %v207 = vld [vmem:[#allocation8] sm:$0xf]
    %v208 = vld [vmem:[#allocation8 + $0x4] sm:$0xf]
    %v209 = vld [vmem:[#allocation8 + $0x8] sm:$0xf]
    %v210 = vld [vmem:[#allocation8 + $0xc] sm:$0xf]
    %v211 = vld [vmem:[#allocation8 + $0x10] sm:$0xf]
    %v212 = vld [vmem:[#allocation8 + $0x14] sm:$0xf]
    %v213 = vld [vmem:[#allocation8 + $0x18] sm:$0xf]
    %v214 = vld [vmem:[#allocation8 + $0x1c] sm:$0xf]
    %v215 = vld [vmem:[#allocation8 + $0x20] sm:$0xf]
    %v216 = vld [vmem:[#allocation8 + $0x24] sm:$0xf]
    %v217 = vld [vmem:[#allocation8 + $0x28] sm:$0xf]
    %v218 = vld [vmem:[#allocation8 + $0x2c] sm:$0xf]
    %v219 = vld [vmem:[#allocation8 + $0x30] sm:$0xf]
    %v220 = vld [vmem:[#allocation8 + $0x34] sm:$0xf]
    %v221 = vld [vmem:[#allocation8 + $0x38] sm:$0xf]
    %v222 = vld [vmem:[#allocation8 + $0x3c] sm:$0xf]
    %v223 = vld [vmem:[%s5] sm:$0x1]
    %v225 = vlaneseq
    %v226 = vshrl.u32 %v225, 7
    %v227 = vsub.s32 0, %v226
    %v228 = vrot.slane %v223, %v227
    %v246 = vunpack.c.l.b16 %v207
    %v247 = vunpack.c.l.b16 %v208
    %v248 = vunpack.c.l.b16 %v209
    %v249 = vunpack.c.l.b16 %v210
    %v250 = vunpack.c.l.b16 %v211
    %v251 = vunpack.c.l.b16 %v212
    %v252 = vunpack.c.l.b16 %v213
    %v253 = vunpack.c.l.b16 %v214
    %v254 = vunpack.c.l.b16 %v215
    %v255 = vunpack.c.l.b16 %v216
    %v256 = vunpack.c.l.b16 %v217
    %v257 = vunpack.c.l.b16 %v218
    %v258 = vunpack.c.l.b16 %v219
    %v259 = vunpack.c.l.b16 %v220
    %v260 = vunpack.c.l.b16 %v221
    %v261 = vunpack.c.l.b16 %v222
    %v262 = vpack.c.b16 %v247, %v246
    %v263 = vpack.c.b16 %v249, %v248
    %v264 = vpack.c.b16 %v251, %v250
    %v265 = vpack.c.b16 %v253, %v252
    %v266 = vpack.c.b16 %v255, %v254
    %v267 = vpack.c.b16 %v257, %v256
    %v268 = vpack.c.b16 %v259, %v258
    %v269 = vpack.c.b16 %v261, %v260
    %278 = vmatprep.subr.bf16.mxu0 0
    %279 = vmatpush1.bf16.msra.mxu0 %v262
    %280 = vmatprep.subr.bf16.mxu0 0
    %281 = vmatpush1.bf16.msra.mxu0 %v263
    %282 = vmatprep.subr.bf16.mxu0 0
    %283 = vmatpush1.bf16.msra.mxu0 %v264
    %284 = vmatprep.subr.bf16.mxu0 0
    %285 = vmatpush1.bf16.msra.mxu0 %v265
    %286 = vmatprep.subr.bf16.mxu0 0
    %287 = vmatpush1.bf16.msra.mxu0 %v266
    %288 = vmatprep.subr.bf16.mxu0 0
    %289 = vmatpush1.bf16.msra.mxu0 %v267
    %290 = vmatprep.subr.bf16.mxu0 0
    %291 = vmatpush1.bf16.msra.mxu0 %v268
    %292 = vmatprep.subr.bf16.mxu0 0
    %293 = vmatpush1.bf16.msra.mxu0 %v269
    %294 = vmatprep.subr.bf16.mxu0 0
    %295 = vmatpush1.bf16.msra.mxu0 0
    %296 = vmatprep.subr.bf16.mxu0 0
    %297 = vmatpush1.bf16.msra.mxu0 0
    %298 = vmatprep.subr.bf16.mxu0 0
    %299 = vmatpush1.bf16.msra.mxu0 0
    %300 = vmatprep.subr.bf16.mxu0 0
    %301 = vmatpush1.bf16.msra.mxu0 0
    %302 = vmatprep.subr.bf16.mxu0 0
    %303 = vmatpush1.bf16.msra.mxu0 0
    %304 = vmatprep.subr.bf16.mxu0 0
    %305 = vmatpush1.bf16.msra.mxu0 0
    %306 = vmatprep.subr.bf16.mxu0 0
    %307 = vmatpush1.bf16.msra.mxu0 0
    %308 = vmatprep.subr.bf16.mxu0 0
    %309 = vmatpush1.bf16.msra.mxu0 0
    %310 = vmatprep.mubr.bf16.mxu0 0
    %311 = vmatmul.mubr.bf16.gmra.mrb[0].mxu0 %v206
    %v312 = vpop.f32.mrb[0].mxu0
    %v313 = vadd.f32 %v228, %v312
    %v314 = vpop.f32.mrb[0].mxu0
    %v315 = vpop.f32.mrb[0].mxu0
    %v316 = vpop.f32.mrb[0].mxu0
    %317 = vdwg.mxu0
    %v318 = vmax.f32 %v313, 0.0
    %v319 = vpack.c.bf16 %v318, %v318
    %v320 = vld [vmem:[#allocation10] sm:$0xf]
    %v321 = vld [vmem:[#allocation10 + $0x4] sm:$0xf]
    %v322 = vld [vmem:[#allocation10 + $0x8] sm:$0xf]
    %v323 = vld [vmem:[#allocation10 + $0xc] sm:$0xf]
    %v324 = vld [vmem:[#allocation10 + $0x10] sm:$0xf]
    %v325 = vld [vmem:[#allocation10 + $0x14] sm:$0xf]
    %v326 = vld [vmem:[#allocation10 + $0x18] sm:$0xf]
    %v327 = vld [vmem:[#allocation10 + $0x1c] sm:$0xf]
    %v328 = vld [vmem:[#allocation10 + $0x20] sm:$0xf]
    %v329 = vld [vmem:[#allocation10 + $0x24] sm:$0xf]
    %v330 = vld [vmem:[#allocation10 + $0x28] sm:$0xf]
    %v331 = vld [vmem:[#allocation10 + $0x2c] sm:$0xf]
    %v332 = vld [vmem:[#allocation10 + $0x30] sm:$0xf]
    %v333 = vld [vmem:[#allocation10 + $0x34] sm:$0xf]
    %v334 = vld [vmem:[#allocation10 + $0x38] sm:$0xf]
    %v335 = vld [vmem:[#allocation10 + $0x3c] sm:$0xf]
    %v352 = vunpack.c.l.b16 %v320
    %v353 = vunpack.c.l.b16 %v321
    %v354 = vunpack.c.l.b16 %v322
    %v355 = vunpack.c.l.b16 %v323
    %v356 = vunpack.c.l.b16 %v324
    %v357 = vunpack.c.l.b16 %v325
    %v358 = vunpack.c.l.b16 %v326
    %v359 = vunpack.c.l.b16 %v327
    %v360 = vunpack.c.l.b16 %v328
    %v361 = vunpack.c.l.b16 %v329
    %v362 = vunpack.c.l.b16 %v330
    %v363 = vunpack.c.l.b16 %v331
    %v364 = vunpack.c.l.b16 %v332
    %v365 = vunpack.c.l.b16 %v333
    %v366 = vunpack.c.l.b16 %v334
    %v367 = vunpack.c.l.b16 %v335
    %v368 = vpack.c.b16 %v353, %v352
    %v369 = vpack.c.b16 %v355, %v354
    %v370 = vpack.c.b16 %v357, %v356
    %v371 = vpack.c.b16 %v359, %v358
    %v372 = vpack.c.b16 %v361, %v360
    %v373 = vpack.c.b16 %v363, %v362
    %v374 = vpack.c.b16 %v365, %v364
    %v375 = vpack.c.b16 %v367, %v366
    %384 = vmatprep.subr.bf16.mxu0 0
    %385 = vmatpush1.bf16.msra.mxu0 %v368
    %386 = vmatprep.subr.bf16.mxu0 0
    %387 = vmatpush1.bf16.msra.mxu0 %v369
    %388 = vmatprep.subr.bf16.mxu0 0
    %389 = vmatpush1.bf16.msra.mxu0 %v370
    %390 = vmatprep.subr.bf16.mxu0 0
    %391 = vmatpush1.bf16.msra.mxu0 %v371
    %392 = vmatprep.subr.bf16.mxu0 0
    %393 = vmatpush1.bf16.msra.mxu0 %v372
    %394 = vmatprep.subr.bf16.mxu0 0
    %395 = vmatpush1.bf16.msra.mxu0 %v373
    %396 = vmatprep.subr.bf16.mxu0 0
    %397 = vmatpush1.bf16.msra.mxu0 %v374
    %398 = vmatprep.subr.bf16.mxu0 0
    %399 = vmatpush1.bf16.msra.mxu0 %v375
    %400 = vmatprep.subr.bf16.mxu0 0
    %401 = vmatpush1.bf16.msra.mxu0 0
    %402 = vmatprep.subr.bf16.mxu0 0
    %403 = vmatpush1.bf16.msra.mxu0 0
    %404 = vmatprep.subr.bf16.mxu0 0
    %405 = vmatpush1.bf16.msra.mxu0 0
    %406 = vmatprep.subr.bf16.mxu0 0
    %407 = vmatpush1.bf16.msra.mxu0 0
    %408 = vmatprep.subr.bf16.mxu0 0
    %409 = vmatpush1.bf16.msra.mxu0 0
    %410 = vmatprep.subr.bf16.mxu0 0
    %411 = vmatpush1.bf16.msra.mxu0 0
    %412 = vmatprep.subr.bf16.mxu0 0
    %413 = vmatpush1.bf16.msra.mxu0 0
    %414 = vmatprep.subr.bf16.mxu0 0
    %415 = vmatpush1.bf16.msra.mxu0 0
    %416 = vmatprep.mubr.bf16.mxu0 0
    %417 = vmatmul.mubr.bf16.gmra.mrb[0].mxu0 %v205
    %v418 = vpop.f32.mrb[0].mxu0
    %v419 = vadd.f32 0.0, %v418
    %v420 = vpop.f32.mrb[0].mxu0
    %v421 = vpop.f32.mrb[0].mxu0
    %v422 = vpop.f32.mrb[0].mxu0
    %423 = vdwg.mxu0
    %424 = vmatprep.subr.bf16.mxu0 0
    %425 = vmatpush1.bf16.msra.mxu0 %v368
    %426 = vmatprep.subr.bf16.mxu0 0
    %427 = vmatpush1.bf16.msra.mxu0 %v369
    %428 = vmatprep.subr.bf16.mxu0 0
    %429 = vmatpush1.bf16.msra.mxu0 %v370
    %430 = vmatprep.subr.bf16.mxu0 0
    %431 = vmatpush1.bf16.msra.mxu0 %v371
    %432 = vmatprep.subr.bf16.mxu0 0
    %433 = vmatpush1.bf16.msra.mxu0 %v372
    %434 = vmatprep.subr.bf16.mxu0 0
    %435 = vmatpush1.bf16.msra.mxu0 %v373
    %436 = vmatprep.subr.bf16.mxu0 0
    %437 = vmatpush1.bf16.msra.mxu0 %v374
    %438 = vmatprep.subr.bf16.mxu0 0
    %439 = vmatpush1.bf16.msra.mxu0 %v375
    %440 = vmatprep.subr.bf16.mxu0 0
    %441 = vmatpush1.bf16.msra.mxu0 0
    %442 = vmatprep.subr.bf16.mxu0 0
    %443 = vmatpush1.bf16.msra.mxu0 0
    %444 = vmatprep.subr.bf16.mxu0 0
    %445 = vmatpush1.bf16.msra.mxu0 0
    %446 = vmatprep.subr.bf16.mxu0 0
    %447 = vmatpush1.bf16.msra.mxu0 0
    %448 = vmatprep.subr.bf16.mxu0 0
    %449 = vmatpush1.bf16.msra.mxu0 0
    %450 = vmatprep.subr.bf16.mxu0 0
    %451 = vmatpush1.bf16.msra.mxu0 0
    %452 = vmatprep.subr.bf16.mxu0 0
    %453 = vmatpush1.bf16.msra.mxu0 0
    %454 = vmatprep.subr.bf16.mxu0 0
    %455 = vmatpush1.bf16.msra.mxu0 0
    %456 = vmatprep.mubr.bf16.mxu0 0
    %457 = vmatmul.mubr.bf16.gmra.mrb[0].mxu0 %v319
    %v458 = vpop.f32.mrb[0].mxu0
    %v459 = vadd.f32 0.0, %v458
    %v460 = vpop.f32.mrb[0].mxu0
    %v461 = vpop.f32.mrb[0].mxu0
    %v462 = vpop.f32.mrb[0].mxu0
    %463 = vdwg.mxu0
    %v464 = vpack.c.bf16 %v459, %v419
    %v465 = vpack.c.bf16 0.0, 0.0
    %v468 = vunpack.c.l.b16 %v464
    %v469 = vunpack.c.h.b16 %v464
    %v470 = vunpack.c.l.b16 %v465
    %v471 = vunpack.c.h.b16 %v465
    %v472 = vpack.c.b16 %v468, %v468
    %v473 = vpack.c.b16 %v469, %v469
    %v474 = vpack.c.b16 %v470, %v470
    %v475 = vpack.c.b16 %v471, %v471
    %480 = vst [vmem:[#allocation11] sm:$0xf] %v472
    %481 = vst [vmem:[#allocation11 + $0x4] sm:$0xf] %v473
    %482 = vst [vmem:[#allocation11 + $0x8] sm:$0xf] %v474
    %483 = vst [vmem:[#allocation11 + $0xc] sm:$0xf] %v475
    %484 = vst [vmem:[#allocation11 + $0x10] sm:$0xf] %v474
    %485 = vst [vmem:[#allocation11 + $0x14] sm:$0xf] %v475
    %486 = vst [vmem:[#allocation11 + $0x18] sm:$0xf] %v474
    %487 = vst [vmem:[#allocation11 + $0x1c] sm:$0xf] %v475
    %488 = vst [vmem:[#allocation11 + $0x20] sm:$0xf] %v474
    %489 = vst [vmem:[#allocation11 + $0x24] sm:$0xf] %v475
    %490 = vst [vmem:[#allocation11 + $0x28] sm:$0xf] %v474
    %491 = vst [vmem:[#allocation11 + $0x2c] sm:$0xf] %v475
    %492 = vst [vmem:[#allocation11 + $0x30] sm:$0xf] %v474
    %493 = vst [vmem:[#allocation11 + $0x34] sm:$0xf] %v475
    %494 = vst [vmem:[#allocation11 + $0x38] sm:$0xf] %v474
    %495 = vst [vmem:[#allocation11 + $0x3c] sm:$0xf] %v475
    // Predicated region
    $region50: #{tpu_custom_call.1} parent=1 // pred_check
      _
    $region51: #{tpu_custom_call.1} parent=1 // pred_check_branch
      %497 = sbr.rel (0) target = $region53
    $region52: #{tpu_custom_call.1} parent=1 // pred_region
      %s499 = ssub.s32 1024, 1024
      %500 = vsyncadd [#allocation4], %s499
      %s501 = sshll.u32 [#allocation11], 4
      %s502 = int_to_ptr.vmem [resolvable:$true] %s501
      %507 = dma.vmem_to_hbm [thread:$0]  %s502, 1024, %s7, [#allocation4], 64, 64, 4
    $region53: #{tpu_custom_call.1} parent=1 // pred_fallthru
      _
    // Predicated region
    $region54: #{tpu_custom_call.1} parent=1 // pred_check
      _
    $region55: #{tpu_custom_call.1} parent=1 // pred_check_branch
      %509 = sbr.rel (0) target = $region57
    $region56: #{tpu_custom_call.1} parent=1 // pred_region
      %510 = dma.done [#allocation4], 1024
    $region57: #{tpu_custom_call.1} parent=1 // pred_fallthru
      _
    %511 = vsyncpa [#allocation3], 1
    %512 = vsyncpa [#allocation6], 1
    %513 = vsyncpa [#allocation9], 1
    %514 = vsyncpa [#allocation4], 1

</llo_original>
